<compile_context>
chip_gen: v5e
topology: v5e:2x2
jax: 0.10.0
libtpu: 0.0.40
codegen_flags: <defaults>
</compile_context>

<pallas_src>
import functools
import math

import jax
import jax.numpy as jnp
from jax import lax
from jax.experimental import pallas as pl
from jax.experimental.pallas import tpu as pltpu  # noqa: F401  (TPU backend)
from jax.scipy.special import erf as jsp_erf

# ----------------------------- configuration --------------------------------
DIM = 128                 # number of channels (lane-dense)
MLP_RATIO = 4
HIDDEN = DIM * MLP_RATIO  # 512
KSIZE = 7                 # conv_kernel_size
PAD = (KSIZE - 1) // 2    # 'same' padding
LS_INIT = 1e-6            # layer-scale init value
LN_EPS = 1e-6
SEQ_LEN = 16              # sequence length L


# ------------------------------ in-kernel math -------------------------------
def _erf_poly(x):
    """Abramowitz & Stegun 7.1.26 erf approximation, |abs err| <= 1.5e-7."""
    a1, a2, a3, a4, a5 = (0.254829592, -0.284496736, 1.421413741,
                          -1.453152027, 1.061405429)
    p = 0.3275911
    ax = jnp.abs(x)
    t = 1.0 / (1.0 + p * ax)
    poly = ((((a5 * t + a4) * t + a3) * t + a2) * t + a1) * t
    y = 1.0 - poly * jnp.exp(-ax * ax)
    return jnp.where(x < 0.0, -y, y)


def _gelu_exact(x):
    """PyTorch nn.GELU() default (erf form)."""
    return 0.5 * x * (1.0 + _erf_poly(x * 0.7071067811865476))


# --------------------------------- kernel ------------------------------------
def _convnext_block_kernel(xp_ref, wdw_ref, bdw_ref, ln_g_ref, ln_b_ref,
                           w1_ref, b1_ref, w2_ref, b2_ref, ls_ref, o_ref,
                           *, L, K, pad, eps):
    # original (unpadded) x for the residual connection
    shortcut = xp_ref[pl.ds(pad, L), :]

    # depthwise conv1d in (L, C) layout: sum of K shifted rows * per-channel
    # weight rows (pure VPU work, no MXU).  wdw_ref[k, c] == torch_w[c, 0, k].
    conv = xp_ref[pl.ds(0, L), :] * wdw_ref[pl.ds(0, 1), :]
    for k in range(1, K):
        conv = conv + xp_ref[pl.ds(k, L), :] * wdw_ref[pl.ds(k, 1), :]
    conv = conv + bdw_ref[...]

    # LayerNorm over channels (biased variance, f32 reductions, rsqrt on EUP)
    mean = jnp.mean(conv, axis=-1, keepdims=True)
    zc = conv - mean
    var = jnp.mean(zc * zc, axis=-1, keepdims=True)
    h = zc * lax.rsqrt(var + eps) * ln_g_ref[...] + ln_b_ref[...]

    # MLP: Linear(dim -> 4*dim) -> GELU -> Linear(4*dim -> dim)   (MXU dots)
    h1 = jnp.dot(h, w1_ref[...], preferred_element_type=jnp.float32) + b1_ref[...]
    h1 = _gelu_exact(h1)
    h2 = jnp.dot(h1, w2_ref[...], preferred_element_type=jnp.float32) + b2_ref[...]

    # layer scale + residual
    o_ref[...] = h2 * ls_ref[...] + shortcut


# --------------------------------- wrapper -----------------------------------
def convnext_block_1d(x, params):
    """Fused ConvNeXtBlock1D forward. x: (L, dim) channels-last, float32."""
    L, C = x.shape
    K = params["conv_w"].shape[0]
    pad = (K - 1) // 2
    H = params["w1"].shape[1]

    # 'same' conv padding; round padded length up to a sublane multiple so the
    # kernel sees an (8,128)-friendly tile (extra zero rows are never read).
    total = L + K - 1
    total_pad = ((total + 7) // 8) * 8
    xp = jnp.pad(x, ((pad, total_pad - L - pad), (0, 0)))

    # pad depthwise weights (K, C) up to 8 sublanes (extra rows unused)
    k_pad = ((K + 7) // 8) * 8
    wdw = jnp.pad(params["conv_w"], ((0, k_pad - K), (0, 0)))

    row = lambda v: v.reshape(1, -1)

    kernel = functools.partial(_convnext_block_kernel,
                               L=L, K=K, pad=pad, eps=LN_EPS)
    return pl.pallas_call(
        kernel,
        grid=(1,),
        in_specs=[
            pl.BlockSpec((total_pad, C), lambda i: (0, 0)),  # padded x
            pl.BlockSpec((k_pad, C), lambda i: (0, 0)),      # dw conv weight
            pl.BlockSpec((1, C), lambda i: (0, 0)),          # dw conv bias
            pl.BlockSpec((1, C), lambda i: (0, 0)),          # LN gamma
            pl.BlockSpec((1, C), lambda i: (0, 0)),          # LN beta
            pl.BlockSpec((C, H), lambda i: (0, 0)),          # fc1 weight (in,out)
            pl.BlockSpec((1, H), lambda i: (0, 0)),          # fc1 bias
            pl.BlockSpec((H, C), lambda i: (0, 0)),          # fc2 weight (in,out)
            pl.BlockSpec((1, C), lambda i: (0, 0)),          # fc2 bias
            pl.BlockSpec((1, C), lambda i: (0, 0)),          # layer-scale gamma
        ],
        out_specs=pl.BlockSpec((L, C), lambda i: (0, 0)),
        out_shape=jax.ShapeDtypeStruct((L, C), jnp.float32),
    )(xp, wdw, row(params["conv_b"]), row(params["ln_g"]), row(params["ln_b"]),
      params["w1"], row(params["b1"]), params["w2"], row(params["b2"]),
      row(params["gamma"]))


# ----------------------------- params & reference ----------------------------
def init_params(key):
    keys = jax.random.split(key, 6)

    def unif(k, shape, fan_in):
        s = 1.0 / math.sqrt(fan_in)
        return jax.random.uniform(k, shape, jnp.float32, -s, s)

    return dict(
        # depthwise conv: conv_w[k, c] == torch weight[c, 0, k]; fan_in = K
        conv_w=unif(keys[0], (KSIZE, DIM), KSIZE),
        conv_b=unif(keys[1], (DIM,), KSIZE),
        ln_g=jnp.ones((DIM,), jnp.float32),
        ln_b=jnp.zeros((DIM,), jnp.float32),
        # Linear weights stored as (in, out) = torch_weight.T
        w1=unif(keys[2], (DIM, HIDDEN), DIM),
        b1=unif(keys[3], (HIDDEN,), DIM),
        w2=unif(keys[4], (HIDDEN, DIM), HIDDEN),
        b2=unif(keys[5], (DIM,), HIDDEN),
        gamma=LS_INIT * jnp.ones((DIM,), jnp.float32),
    )


def reference_forward(x, p, eps=LN_EPS):
    """Plain-JAX reference of the PyTorch ConvNeXtBlock1D forward."""
    L, _ = x.shape
    K = p["conv_w"].shape[0]
    pad = (K - 1) // 2
    xp = jnp.pad(x, ((pad, pad), (0, 0)))
    conv = p["conv_b"][None, :]
    for k in range(K):
        conv = conv + xp[k:k + L, :] * p["conv_w"][k][None, :]
    mean = jnp.mean(conv, axis=-1, keepdims=True)
    var = jnp.mean((conv - mean) ** 2, axis=-1, keepdims=True)
    h = (conv - mean) * lax.rsqrt(var + eps) * p["ln_g"][None, :] + p["ln_b"][None, :]
    h1 = jnp.dot(h, p["w1"], precision=lax.Precision.HIGHEST) + p["b1"][None, :]
    h1 = 0.5 * h1 * (1.0 + jsp_erf(h1 * 0.7071067811865476))   # exact GELU
    h2 = jnp.dot(h1, p["w2"], precision=lax.Precision.HIGHEST) + p["b2"][None, :]
    return h2 * p["gamma"][None, :] + x


# TODO(synk): nn.Dropout layers in Mlp have p=0.0 (eval no-op) and are omitted.

# ----------------------------------- main -------------------------------------
if __name__ == "__main__":
    key = jax.random.PRNGKey(0)
    k_x, k_p = jax.random.split(key)
    params = init_params(k_p)
    x = jax.random.normal(k_x, (SEQ_LEN, DIM), jnp.float32)

    fwd = jax.jit(convnext_block_1d)

    # run with the module-default layer scale (1e-6)
    out = jax.block_until_ready(fwd(x, params))
    assert out.shape == (SEQ_LEN, DIM)
    assert bool(jnp.all(jnp.isfinite(out)))

    # correctness check against a plain-JAX reference with layer scale = 1.0
    # (so the conv/LN/MLP branch is actually visible in the output)
    params_ls1 = dict(params, gamma=jnp.ones((DIM,), jnp.float32))
    out1 = jax.block_until_ready(fwd(x, params_ls1))
    ref1 = reference_forward(x, params_ls1)
    max_err = float(jnp.max(jnp.abs(out1 - ref1)))
    assert jnp.allclose(out1, ref1, rtol=2e-2, atol=2e-2), max_err

    print("KERNEL_OK")
</pallas_src>

<mosaic_0001>
module attributes {stable_mosaic.version = 11 : i64} {
  func.func @_convnext_block_kernel(%arg0: i32, %arg1: memref<24x128xf32, #tpu.memory_space<vmem>>, %arg2: memref<8x128xf32, #tpu.memory_space<vmem>>, %arg3: memref<1x128xf32, #tpu.memory_space<vmem>>, %arg4: memref<1x128xf32, #tpu.memory_space<vmem>>, %arg5: memref<1x128xf32, #tpu.memory_space<vmem>>, %arg6: memref<128x512xf32, #tpu.memory_space<vmem>>, %arg7: memref<1x512xf32, #tpu.memory_space<vmem>>, %arg8: memref<512x128xf32, #tpu.memory_space<vmem>>, %arg9: memref<1x128xf32, #tpu.memory_space<vmem>>, %arg10: memref<1x128xf32, #tpu.memory_space<vmem>>, %arg11: memref<16x128xf32, #tpu.memory_space<vmem>>) attributes {dimension_semantics = [#tpu.dimension_semantics<arbitrary>], iteration_bounds = array<i64: 1>, scalar_prefetch = 0 : i64, scratch_operands = 0 : i64, tpu.core_type = #tpu.core_type<tc>, window_params = [{pipeline_mode = #tpu.pipeline_mode<synchronous>, transform_indices = @transform_0, window_bounds = array<i64: 24, 128>}, {pipeline_mode = #tpu.pipeline_mode<synchronous>, transform_indices = @transform_1, window_bounds = array<i64: 8, 128>}, {pipeline_mode = #tpu.pipeline_mode<synchronous>, transform_indices = @transform_2, window_bounds = array<i64: 1, 128>}, {pipeline_mode = #tpu.pipeline_mode<synchronous>, transform_indices = @transform_3, window_bounds = array<i64: 1, 128>}, {pipeline_mode = #tpu.pipeline_mode<synchronous>, transform_indices = @transform_4, window_bounds = array<i64: 1, 128>}, {pipeline_mode = #tpu.pipeline_mode<synchronous>, transform_indices = @transform_5, window_bounds = array<i64: 128, 512>}, {pipeline_mode = #tpu.pipeline_mode<synchronous>, transform_indices = @transform_6, window_bounds = array<i64: 1, 512>}, {pipeline_mode = #tpu.pipeline_mode<synchronous>, transform_indices = @transform_7, window_bounds = array<i64: 512, 128>}, {pipeline_mode = #tpu.pipeline_mode<synchronous>, transform_indices = @transform_8, window_bounds = array<i64: 1, 128>}, {pipeline_mode = #tpu.pipeline_mode<synchronous>, transform_indices = @transform_9, window_bounds = array<i64: 1, 128>}, {pipeline_mode = #tpu.pipeline_mode<synchronous>, transform_indices = @transform_10, window_bounds = array<i64: 16, 128>}]} {
    %c3 = arith.constant 3 : index
    %c0 = arith.constant 0 : index
    %0 = vector.load %arg1[%c3, %c0] : memref<24x128xf32, #tpu.memory_space<vmem>>, vector<16x128xf32>
    %c0_0 = arith.constant 0 : index
    %c0_1 = arith.constant 0 : index
    %1 = vector.load %arg1[%c0_0, %c0_1] : memref<24x128xf32, #tpu.memory_space<vmem>>, vector<16x128xf32>
    %c0_2 = arith.constant 0 : index
    %c0_3 = arith.constant 0 : index
    %2 = vector.load %arg2[%c0_2, %c0_3] : memref<8x128xf32, #tpu.memory_space<vmem>>, vector<1x128xf32>
    %3 = vector.broadcast %2 : vector<1x128xf32> to vector<16x128xf32>
    %4 = arith.mulf %1, %3 : vector<16x128xf32>
    %c1 = arith.constant 1 : index
    %c0_4 = arith.constant 0 : index
    %5 = vector.load %arg1[%c1, %c0_4] : memref<24x128xf32, #tpu.memory_space<vmem>>, vector<16x128xf32>
    %c1_5 = arith.constant 1 : index
    %c0_6 = arith.constant 0 : index
    %6 = vector.load %arg2[%c1_5, %c0_6] : memref<8x128xf32, #tpu.memory_space<vmem>>, vector<1x128xf32>
    %7 = vector.broadcast %6 : vector<1x128xf32> to vector<16x128xf32>
    %8 = arith.mulf %5, %7 : vector<16x128xf32>
    %9 = arith.addf %4, %8 : vector<16x128xf32>
    %c2 = arith.constant 2 : index
    %c0_7 = arith.constant 0 : index
    %10 = vector.load %arg1[%c2, %c0_7] : memref<24x128xf32, #tpu.memory_space<vmem>>, vector<16x128xf32>
    %c2_8 = arith.constant 2 : index
    %c0_9 = arith.constant 0 : index
    %11 = vector.load %arg2[%c2_8, %c0_9] : memref<8x128xf32, #tpu.memory_space<vmem>>, vector<1x128xf32>
    %12 = vector.broadcast %11 : vector<1x128xf32> to vector<16x128xf32>
    %13 = arith.mulf %10, %12 : vector<16x128xf32>
    %14 = arith.addf %9, %13 : vector<16x128xf32>
    %c3_10 = arith.constant 3 : index
    %c0_11 = arith.constant 0 : index
    %15 = vector.load %arg1[%c3_10, %c0_11] : memref<24x128xf32, #tpu.memory_space<vmem>>, vector<16x128xf32>
    %c3_12 = arith.constant 3 : index
    %c0_13 = arith.constant 0 : index
    %16 = vector.load %arg2[%c3_12, %c0_13] : memref<8x128xf32, #tpu.memory_space<vmem>>, vector<1x128xf32>
    %17 = vector.broadcast %16 : vector<1x128xf32> to vector<16x128xf32>
    %18 = arith.mulf %15, %17 : vector<16x128xf32>
    %19 = arith.addf %14, %18 : vector<16x128xf32>
    %c4 = arith.constant 4 : index
    %c0_14 = arith.constant 0 : index
    %20 = vector.load %arg1[%c4, %c0_14] : memref<24x128xf32, #tpu.memory_space<vmem>>, vector<16x128xf32>
    %c4_15 = arith.constant 4 : index
    %c0_16 = arith.constant 0 : index
    %21 = vector.load %arg2[%c4_15, %c0_16] : memref<8x128xf32, #tpu.memory_space<vmem>>, vector<1x128xf32>
    %22 = vector.broadcast %21 : vector<1x128xf32> to vector<16x128xf32>
    %23 = arith.mulf %20, %22 : vector<16x128xf32>
    %24 = arith.addf %19, %23 : vector<16x128xf32>
    %c5 = arith.constant 5 : index
    %c0_17 = arith.constant 0 : index
    %25 = vector.load %arg1[%c5, %c0_17] : memref<24x128xf32, #tpu.memory_space<vmem>>, vector<16x128xf32>
    %c5_18 = arith.constant 5 : index
    %c0_19 = arith.constant 0 : index
    %26 = vector.load %arg2[%c5_18, %c0_19] : memref<8x128xf32, #tpu.memory_space<vmem>>, vector<1x128xf32>
    %27 = vector.broadcast %26 : vector<1x128xf32> to vector<16x128xf32>
    %28 = arith.mulf %25, %27 : vector<16x128xf32>
    %29 = arith.addf %24, %28 : vector<16x128xf32>
    %c6 = arith.constant 6 : index
    %c0_20 = arith.constant 0 : index
    %30 = vector.load %arg1[%c6, %c0_20] : memref<24x128xf32, #tpu.memory_space<vmem>>, vector<16x128xf32>
    %c6_21 = arith.constant 6 : index
    %c0_22 = arith.constant 0 : index
    %31 = vector.load %arg2[%c6_21, %c0_22] : memref<8x128xf32, #tpu.memory_space<vmem>>, vector<1x128xf32>
    %32 = vector.broadcast %31 : vector<1x128xf32> to vector<16x128xf32>
    %33 = arith.mulf %30, %32 : vector<16x128xf32>
    %34 = arith.addf %29, %33 : vector<16x128xf32>
    %c0_23 = arith.constant 0 : index
    %c0_24 = arith.constant 0 : index
    %35 = vector.load %arg3[%c0_23, %c0_24] : memref<1x128xf32, #tpu.memory_space<vmem>>, vector<1x128xf32>
    %36 = vector.broadcast %35 : vector<1x128xf32> to vector<16x128xf32>
    %37 = arith.addf %34, %36 : vector<16x128xf32>
    %cst = arith.constant dense<0.000000e+00> : vector<16xf32>
    %38 = vector.multi_reduction <add>, %37, %cst [1] : vector<16x128xf32> to vector<16xf32>
    %39 = vector.shape_cast %38 : vector<16xf32> to vector<16x1xf32>
    %cst_25 = arith.constant 1.280000e+02 : f32
    %40 = vector.broadcast %cst_25 : f32 to vector<16x1xf32>
    %41 = arith.divf %39, %40 : vector<16x1xf32>
    %42 = vector.broadcast %41 : vector<16x1xf32> to vector<16x128xf32>
    %43 = arith.subf %37, %42 : vector<16x128xf32>
    %44 = arith.mulf %43, %43 : vector<16x128xf32>
    %cst_26 = arith.constant dense<0.000000e+00> : vector<16xf32>
    %45 = vector.multi_reduction <add>, %44, %cst_26 [1] : vector<16x128xf32> to vector<16xf32>
    %46 = vector.shape_cast %45 : vector<16xf32> to vector<16x1xf32>
    %cst_27 = arith.constant 1.280000e+02 : f32
    %47 = vector.broadcast %cst_27 : f32 to vector<16x1xf32>
    %48 = arith.divf %46, %47 : vector<16x1xf32>
    %cst_28 = arith.constant 9.99999997E-7 : f32
    %49 = vector.broadcast %cst_28 : f32 to vector<16x1xf32>
    %50 = arith.addf %48, %49 : vector<16x1xf32>
    %51 = math.rsqrt %50 : vector<16x1xf32>
    %52 = vector.broadcast %51 : vector<16x1xf32> to vector<16x128xf32>
    %53 = arith.mulf %43, %52 : vector<16x128xf32>
    %c0_29 = arith.constant 0 : index
    %c0_30 = arith.constant 0 : index
    %54 = vector.load %arg4[%c0_29, %c0_30] : memref<1x128xf32, #tpu.memory_space<vmem>>, vector<1x128xf32>
    %55 = vector.broadcast %54 : vector<1x128xf32> to vector<16x128xf32>
    %56 = arith.mulf %53, %55 : vector<16x128xf32>
    %c0_31 = arith.constant 0 : index
    %c0_32 = arith.constant 0 : index
    %57 = vector.load %arg5[%c0_31, %c0_32] : memref<1x128xf32, #tpu.memory_space<vmem>>, vector<1x128xf32>
    %58 = vector.broadcast %57 : vector<1x128xf32> to vector<16x128xf32>
    %59 = arith.addf %56, %58 : vector<16x128xf32>
    %c0_33 = arith.constant 0 : index
    %c0_34 = arith.constant 0 : index
    %60 = vector.load %arg6[%c0_33, %c0_34] : memref<128x512xf32, #tpu.memory_space<vmem>>, vector<128x512xf32>
    %cst_35 = arith.constant dense<0.000000e+00> : vector<16x512xf32>
    %61 = tpu.matmul %59, %60, %cst_35 {dimension_numbers = #tpu.dot_dimension_numbers<[1], [0], [0], [1], [0, 0, 1, 1], [], []>} : vector<16x128xf32>, vector<128x512xf32>, vector<16x512xf32> -> vector<16x512xf32>
    %c0_36 = arith.constant 0 : index
    %c0_37 = arith.constant 0 : index
    %62 = vector.load %arg7[%c0_36, %c0_37] : memref<1x512xf32, #tpu.memory_space<vmem>>, vector<1x512xf32>
    %63 = vector.broadcast %62 : vector<1x512xf32> to vector<16x512xf32>
    %64 = arith.addf %61, %63 : vector<16x512xf32>
    %cst_38 = arith.constant 5.000000e-01 : f32
    %65 = vector.broadcast %cst_38 : f32 to vector<16x512xf32>
    %66 = arith.mulf %65, %64 : vector<16x512xf32>
    %cst_39 = arith.constant 0.707106769 : f32
    %67 = vector.broadcast %cst_39 : f32 to vector<16x512xf32>
    %68 = arith.mulf %64, %67 : vector<16x512xf32>
    %69 = math.absf %68 : vector<16x512xf32>
    %cst_40 = arith.constant 0.327591091 : f32
    %70 = vector.broadcast %cst_40 : f32 to vector<16x512xf32>
    %71 = arith.mulf %70, %69 : vector<16x512xf32>
    %cst_41 = arith.constant 1.000000e+00 : f32
    %72 = vector.broadcast %cst_41 : f32 to vector<16x512xf32>
    %73 = arith.addf %72, %71 : vector<16x512xf32>
    %cst_42 = arith.constant 1.000000e+00 : f32
    %74 = vector.broadcast %cst_42 : f32 to vector<16x512xf32>
    %75 = arith.divf %74, %73 : vector<16x512xf32>
    %cst_43 = arith.constant 1.06140542 : f32
    %76 = vector.broadcast %cst_43 : f32 to vector<16x512xf32>
    %77 = arith.mulf %76, %75 : vector<16x512xf32>
    %cst_44 = arith.constant -1.45315206 : f32
    %78 = vector.broadcast %cst_44 : f32 to vector<16x512xf32>
    %79 = arith.addf %77, %78 : vector<16x512xf32>
    %80 = arith.mulf %79, %75 : vector<16x512xf32>
    %cst_45 = arith.constant 1.42141378 : f32
    %81 = vector.broadcast %cst_45 : f32 to vector<16x512xf32>
    %82 = arith.addf %80, %81 : vector<16x512xf32>
    %83 = arith.mulf %82, %75 : vector<16x512xf32>
    %cst_46 = arith.constant -0.284496725 : f32
    %84 = vector.broadcast %cst_46 : f32 to vector<16x512xf32>
    %85 = arith.addf %83, %84 : vector<16x512xf32>
    %86 = arith.mulf %85, %75 : vector<16x512xf32>
    %cst_47 = arith.constant 0.254829586 : f32
    %87 = vector.broadcast %cst_47 : f32 to vector<16x512xf32>
    %88 = arith.addf %86, %87 : vector<16x512xf32>
    %89 = arith.mulf %88, %75 : vector<16x512xf32>
    %cst_48 = arith.constant 0.000000e+00 : f32
    %90 = vector.broadcast %cst_48 : f32 to vector<16x512xf32>
    %91 = arith.subf %90, %69 : vector<16x512xf32>
    %92 = arith.mulf %91, %69 : vector<16x512xf32>
    %93 = math.exp %92 : vector<16x512xf32>
    %94 = arith.mulf %89, %93 : vector<16x512xf32>
    %cst_49 = arith.constant 1.000000e+00 : f32
    %95 = vector.broadcast %cst_49 : f32 to vector<16x512xf32>
    %96 = arith.subf %95, %94 : vector<16x512xf32>
    %cst_50 = arith.constant 0.000000e+00 : f32
    %97 = vector.broadcast %cst_50 : f32 to vector<16x512xf32>
    %98 = arith.cmpf olt, %68, %97 : vector<16x512xf32>
    %cst_51 = arith.constant 0.000000e+00 : f32
    %99 = vector.broadcast %cst_51 : f32 to vector<16x512xf32>
    %100 = arith.subf %99, %96 : vector<16x512xf32>
    %101 = arith.select %98, %100, %96 : vector<16x512xi1>, vector<16x512xf32>
    %cst_52 = arith.constant 1.000000e+00 : f32
    %102 = vector.broadcast %cst_52 : f32 to vector<16x512xf32>
    %103 = arith.addf %102, %101 : vector<16x512xf32>
    %104 = arith.mulf %66, %103 : vector<16x512xf32>
    %c0_53 = arith.constant 0 : index
    %c0_54 = arith.constant 0 : index
    %105 = vector.load %arg8[%c0_53, %c0_54] : memref<512x128xf32, #tpu.memory_space<vmem>>, vector<512x128xf32>
    %cst_55 = arith.constant dense<0.000000e+00> : vector<16x128xf32>
    %106 = tpu.matmul %104, %105, %cst_55 {dimension_numbers = #tpu.dot_dimension_numbers<[1], [0], [0], [1], [0, 0, 1, 1], [], []>} : vector<16x512xf32>, vector<512x128xf32>, vector<16x128xf32> -> vector<16x128xf32>
    %c0_56 = arith.constant 0 : index
    %c0_57 = arith.constant 0 : index
    %107 = vector.load %arg9[%c0_56, %c0_57] : memref<1x128xf32, #tpu.memory_space<vmem>>, vector<1x128xf32>
    %108 = vector.broadcast %107 : vector<1x128xf32> to vector<16x128xf32>
    %109 = arith.addf %106, %108 : vector<16x128xf32>
    %c0_58 = arith.constant 0 : index
    %c0_59 = arith.constant 0 : index
    %110 = vector.load %arg10[%c0_58, %c0_59] : memref<1x128xf32, #tpu.memory_space<vmem>>, vector<1x128xf32>
    %111 = vector.broadcast %110 : vector<1x128xf32> to vector<16x128xf32>
    %112 = arith.mulf %109, %111 : vector<16x128xf32>
    %113 = arith.addf %112, %0 : vector<16x128xf32>
    %c0_60 = arith.constant 0 : index
    %c0_61 = arith.constant 0 : index
    %114 = vector.load %arg11[%c0_60, %c0_61] : memref<16x128xf32, #tpu.memory_space<vmem>>, vector<16x128xf32>
    tpu.vector_store %arg11[%c0_60, %c0_61], %113 {strides = array<i32>} : memref<16x128xf32, #tpu.memory_space<vmem>>, vector<16x128xf32>,
    return
  }
  func.func @transform_0(%arg0: i32) -> (i32, i32) {
    %c0_i32 = arith.constant 0 : i32
    %c0_i32_0 = arith.constant 0 : i32
    %c0_i32_1 = arith.constant 0 : i32
    return %c0_i32, %c0_i32_0 : i32, i32
  }
  func.func @transform_1(%arg0: i32) -> (i32, i32) {
    %c0_i32 = arith.constant 0 : i32
    %c0_i32_0 = arith.constant 0 : i32
    %c0_i32_1 = arith.constant 0 : i32
    return %c0_i32, %c0_i32_0 : i32, i32
  }
  func.func @transform_2(%arg0: i32) -> (i32, i32) {
    %c0_i32 = arith.constant 0 : i32
    %c0_i32_0 = arith.constant 0 : i32
    %c0_i32_1 = arith.constant 0 : i32
    return %c0_i32, %c0_i32_0 : i32, i32
  }
  func.func @transform_3(%arg0: i32) -> (i32, i32) {
    %c0_i32 = arith.constant 0 : i32
    %c0_i32_0 = arith.constant 0 : i32
    %c0_i32_1 = arith.constant 0 : i32
    return %c0_i32, %c0_i32_0 : i32, i32
  }
  func.func @transform_4(%arg0: i32) -> (i32, i32) {
    %c0_i32 = arith.constant 0 : i32
    %c0_i32_0 = arith.constant 0 : i32
    %c0_i32_1 = arith.constant 0 : i32
    return %c0_i32, %c0_i32_0 : i32, i32
  }
  func.func @transform_5(%arg0: i32) -> (i32, i32) {
    %c0_i32 = arith.constant 0 : i32
    %c0_i32_0 = arith.constant 0 : i32
    %c0_i32_1 = arith.constant 0 : i32
    return %c0_i32, %c0_i32_0 : i32, i32
  }
  func.func @transform_6(%arg0: i32) -> (i32, i32) {
    %c0_i32 = arith.constant 0 : i32
    %c0_i32_0 = arith.constant 0 : i32
    %c0_i32_1 = arith.constant 0 : i32
    return %c0_i32, %c0_i32_0 : i32, i32
  }
  func.func @transform_7(%arg0: i32) -> (i32, i32) {
    %c0_i32 = arith.constant 0 : i32
    %c0_i32_0 = arith.constant 0 : i32
    %c0_i32_1 = arith.constant 0 : i32
    return %c0_i32, %c0_i32_0 : i32, i32
  }
  func.func @transform_8(%arg0: i32) -> (i32, i32) {
    %c0_i32 = arith.constant 0 : i32
    %c0_i32_0 = arith.constant 0 : i32
    %c0_i32_1 = arith.constant 0 : i32
    return %c0_i32, %c0_i32_0 : i32, i32
  }
  func.func @transform_9(%arg0: i32) -> (i32, i32) {
    %c0_i32 = arith.constant 0 : i32
    %c0_i32_0 = arith.constant 0 : i32
    %c0_i32_1 = arith.constant 0 : i32
    return %c0_i32, %c0_i32_0 : i32, i32
  }
  func.func @transform_10(%arg0: i32) -> (i32, i32) {
    %c0_i32 = arith.constant 0 : i32
    %c0_i32_0 = arith.constant 0 : i32
    %c0_i32_1 = arith.constant 0 : i32
    return %c0_i32, %c0_i32_0 : i32, i32
  }
}

</mosaic_0001>

<llo_original>
// kernel: convnext_block_1d.1
$region0: #{convnext_block_1d.1}
  #allocation0 [shape = 'u32[]', space=smem, size = 0x4, offset = 0x4, fixed_abs, tag = 'smem constant byte address 0x4 - core index']
  #allocation1 [shape = 'u32[72,128]{1,0:T(1,128)}', space=vmem, size = 0x9000, scoped, tag = 'internal scratch']
  %s0 = inlined_call_operand.vmem [shape: f32[24,128], index: 0, kind: input, shape index: {}]
  %s1 = inlined_call_operand.vmem [shape: f32[8,128], index: 1, kind: input, shape index: {}]
  %s2 = inlined_call_operand.vmem [shape: f32[1,128], index: 2, kind: input, shape index: {}]
  %s3 = inlined_call_operand.vmem [shape: f32[1,128], index: 3, kind: input, shape index: {}]
  %s4 = inlined_call_operand.vmem [shape: f32[1,128], index: 4, kind: input, shape index: {}]
  %s5 = inlined_call_operand.hbm [shape: f32[128,512], index: 5, kind: input, shape index: {}]
  %s6 = inlined_call_operand.vmem [shape: f32[1,512], index: 6, kind: input, shape index: {}]
  %s7 = inlined_call_operand.hbm [shape: f32[512,128], index: 7, kind: input, shape index: {}]
  %s8 = inlined_call_operand.vmem [shape: f32[1,128], index: 8, kind: input, shape index: {}]
  %s9 = inlined_call_operand.vmem [shape: f32[1,128], index: 9, kind: input, shape index: {}]
  %s10 = inlined_call_operand.hbm [shape: f32[16,128], index: 10, kind: output, shape index: {}]
  %s11 = sld [smem:[#allocation0]]
  $region58: #{convnext_block_1d.1} parent=0
    _
  %s13 = ssub.s32 1, %s11
  %s14 = scalar_select 0, %s13, %s11
  $region1: #{convnext_block_1d.1} parent=0
    #allocation2 [shape = 'u8[262144]{0}', space=vmem, size = 0x40000, scoped, tag = 'input window, operand 5, single buffered']
    #allocation3 [shape = 's32[1]{0}', space=sflag, size = 0x4, scoped, tag = 'scoped memory for convnext_block_1d.1']
    #allocation4 [shape = 's32[1]{0}', space=sflag, size = 0x4, scoped, tag = 'scoped memory for convnext_block_1d.1']
    #allocation5 [shape = 'u8[262144]{0}', space=vmem, size = 0x40000, scoped, tag = 'input window, operand 7, single buffered']
    #allocation6 [shape = 's32[1]{0}', space=sflag, size = 0x4, scoped, tag = 'scoped memory for convnext_block_1d.1']
    #allocation7 [shape = 'u8[8192]{0}', space=vmem, size = 0x2000, scoped, tag = 'output window, operand 0, single buffered']
    %15 = vsyncpa [#allocation3], 0
    %16 = vsyncpa [#allocation6], 0
    %17 = vsyncpa [#allocation4], 0
    // Predicated region
    $region2: #{convnext_block_1d.1} parent=1 // pred_check
      _
    $region3: #{convnext_block_1d.1} parent=1 // pred_check_branch
      %19 = sbr.rel (0) target = $region5
    $region4: #{convnext_block_1d.1} parent=1 // pred_region
      _
    $region5: #{convnext_block_1d.1} parent=1 // pred_fallthru
      _
    // Predicated region
    $region6: #{convnext_block_1d.1} parent=1 // pred_check
      _
    $region7: #{convnext_block_1d.1} parent=1 // pred_check_branch
      %21 = sbr.rel (0) target = $region9
    $region8: #{convnext_block_1d.1} parent=1 // pred_region
      _
    $region9: #{convnext_block_1d.1} parent=1 // pred_fallthru
      _
    // Predicated region
    $region10: #{convnext_block_1d.1} parent=1 // pred_check
      _
    $region11: #{convnext_block_1d.1} parent=1 // pred_check_branch
      %23 = sbr.rel (0) target = $region13
    $region12: #{convnext_block_1d.1} parent=1 // pred_region
      _
    $region13: #{convnext_block_1d.1} parent=1 // pred_fallthru
      _
    // Predicated region
    $region14: #{convnext_block_1d.1} parent=1 // pred_check
      _
    $region15: #{convnext_block_1d.1} parent=1 // pred_check_branch
      %25 = sbr.rel (0) target = $region17
    $region16: #{convnext_block_1d.1} parent=1 // pred_region
      _
    $region17: #{convnext_block_1d.1} parent=1 // pred_fallthru
      _
    // Predicated region
    $region18: #{convnext_block_1d.1} parent=1 // pred_check
      _
    $region19: #{convnext_block_1d.1} parent=1 // pred_check_branch
      %27 = sbr.rel (0) target = $region21
    $region20: #{convnext_block_1d.1} parent=1 // pred_region
      _
    $region21: #{convnext_block_1d.1} parent=1 // pred_fallthru
      _
    // Predicated region
    $region22: #{convnext_block_1d.1} parent=1 // pred_check
      _
    $region23: #{convnext_block_1d.1} parent=1 // pred_check_branch
      %29 = sbr.rel (0) target = $region25
    $region24: #{convnext_block_1d.1} parent=1 // pred_region
      %31 = vsyncadd [#allocation3], 0
      %s32 = sshll.u32 %s5, 4
      %s33 = int_to_ptr.hbm [resolvable:$true] %s32
      %s34 = sshll.u32 [#allocation2], 4
      %s35 = int_to_ptr.vmem [resolvable:$true] %s34
      %40 = dma.hbm_to_vmem [thread:$0]  %s33, 8192, %s35, [#allocation3], 512, 512, 32
    $region25: #{convnext_block_1d.1} parent=1 // pred_fallthru
      _
    // Predicated region
    $region26: #{convnext_block_1d.1} parent=1 // pred_check
      _
    $region27: #{convnext_block_1d.1} parent=1 // pred_check_branch
      %42 = sbr.rel (0) target = $region29
    $region28: #{convnext_block_1d.1} parent=1 // pred_region
      _
    $region29: #{convnext_block_1d.1} parent=1 // pred_fallthru
      _
    // Predicated region
    $region30: #{convnext_block_1d.1} parent=1 // pred_check
      _
    $region31: #{convnext_block_1d.1} parent=1 // pred_check_branch
      %44 = sbr.rel (0) target = $region33
    $region32: #{convnext_block_1d.1} parent=1 // pred_region
      %46 = vsyncadd [#allocation6], 0
      %s47 = sshll.u32 %s7, 4
      %s48 = int_to_ptr.hbm [resolvable:$true] %s47
      %s49 = sshll.u32 [#allocation5], 4
      %s50 = int_to_ptr.vmem [resolvable:$true] %s49
      %55 = dma.hbm_to_vmem [thread:$0]  %s48, 8192, %s50, [#allocation6], 128, 128, 8
    $region33: #{convnext_block_1d.1} parent=1 // pred_fallthru
      _
    // Predicated region
    $region34: #{convnext_block_1d.1} parent=1 // pred_check
      _
    $region35: #{convnext_block_1d.1} parent=1 // pred_check_branch
      %57 = sbr.rel (0) target = $region37
    $region36: #{convnext_block_1d.1} parent=1 // pred_region
      _
    $region37: #{convnext_block_1d.1} parent=1 // pred_fallthru
      _
    // Predicated region
    $region38: #{convnext_block_1d.1} parent=1 // pred_check
      _
    $region39: #{convnext_block_1d.1} parent=1 // pred_check_branch
      %59 = sbr.rel (0) target = $region41
    $region40: #{convnext_block_1d.1} parent=1 // pred_region
      _
    $region41: #{convnext_block_1d.1} parent=1 // pred_fallthru
      _
    // Predicated region
    $region42: #{convnext_block_1d.1} parent=1 // pred_check
      _
    $region43: #{convnext_block_1d.1} parent=1 // pred_check_branch
      %61 = sbr.rel (0) target = $region45
    $region44: #{convnext_block_1d.1} parent=1 // pred_region
      %63 = dma.done [#allocation3], 8192
    $region45: #{convnext_block_1d.1} parent=1 // pred_fallthru
      _
    // Predicated region
    $region46: #{convnext_block_1d.1} parent=1 // pred_check
      _
    $region47: #{convnext_block_1d.1} parent=1 // pred_check_branch
      %65 = sbr.rel (0) target = $region49
    $region48: #{convnext_block_1d.1} parent=1 // pred_region
      %67 = dma.done [#allocation6], 8192
    $region49: #{convnext_block_1d.1} parent=1 // pred_fallthru
      _
    %v68 = vld [vmem:[%s0 + $0x3] sm:$0xff]
    %v69 = vld [vmem:[%s0 + $0xb] sm:$0xff]
    %v70 = vld [vmem:[%s0] sm:$0xff]
    %v71 = vld [vmem:[%s0 + $0x8] sm:$0xff]
    %v72 = vld [vmem:[%s1] sm:$0x1]
    %v73 = vperm.slane %v72, 0
    %v74 = vmul.f32 %v70, %v73
    %v75 = vmul.f32 %v71, %v73
    %v76 = vld [vmem:[%s0 + $0x1] sm:$0xff]
    %v77 = vld [vmem:[%s0 + $0x9] sm:$0xff]
    %v78 = vld [vmem:[%s1 + $0x1] sm:$0x1]
    %v79 = vperm.slane %v78, 0
    %v80 = vmul.f32 %v76, %v79
    %v81 = vmul.f32 %v77, %v79
    %v82 = vadd.f32 %v74, %v80
    %v83 = vadd.f32 %v75, %v81
    %v84 = vld [vmem:[%s0 + $0x2] sm:$0xff]
    %v85 = vld [vmem:[%s0 + $0xa] sm:$0xff]
    %v86 = vld [vmem:[%s1 + $0x2] sm:$0x1]
    %v87 = vperm.slane %v86, 0
    %v88 = vmul.f32 %v84, %v87
    %v89 = vmul.f32 %v85, %v87
    %v90 = vadd.f32 %v82, %v88
    %v91 = vadd.f32 %v83, %v89
    %v92 = vld [vmem:[%s1 + $0x3] sm:$0x1]
    %v93 = vperm.slane %v92, 0
    %v94 = vmul.f32 %v68, %v93
    %v95 = vmul.f32 %v69, %v93
    %v96 = vadd.f32 %v90, %v94
    %v97 = vadd.f32 %v91, %v95
    %v98 = vld [vmem:[%s0 + $0x4] sm:$0xff]
    %v99 = vld [vmem:[%s0 + $0xc] sm:$0xff]
    %v100 = vld [vmem:[%s1 + $0x4] sm:$0x1]
    %v101 = vperm.slane %v100, 0
    %v102 = vmul.f32 %v98, %v101
    %v103 = vmul.f32 %v99, %v101
    %v104 = vadd.f32 %v96, %v102
    %v105 = vadd.f32 %v97, %v103
    %v106 = vld [vmem:[%s0 + $0x5] sm:$0xff]
    %v107 = vld [vmem:[%s0 + $0xd] sm:$0xff]
    %v108 = vld [vmem:[%s1 + $0x5] sm:$0x1]
    %v109 = vperm.slane %v108, 0
    %v110 = vmul.f32 %v106, %v109
    %v111 = vmul.f32 %v107, %v109
    %v112 = vadd.f32 %v104, %v110
    %v113 = vadd.f32 %v105, %v111
    %v114 = vld [vmem:[%s0 + $0x6] sm:$0xff]
    %v115 = vld [vmem:[%s0 + $0xe] sm:$0xff]
    %v116 = vld [vmem:[%s1 + $0x6] sm:$0x1]
    %v117 = vperm.slane %v116, 0
    %v118 = vmul.f32 %v114, %v117
    %v119 = vmul.f32 %v115, %v117
    %v120 = vadd.f32 %v112, %v118
    %v121 = vadd.f32 %v113, %v119
    %v122 = vld [vmem:[%s2] sm:$0x1]
    %v124 = vperm.slane %v122, 0
    %v126 = vadd.f32 %v120, %v124
    %v127 = vadd.f32 %v121, %v124
    %128 = vadd.xlane.f32.xlu0 %v126
    %v129 = vpop.xlane.xlu0 %128
    %130 = vadd.xlane.f32.xlu0 %v127
    %v131 = vpop.xlane.xlu0 %130
    %v132 = vrcp.pop 128.0
    %v133 = vmul.f32 128.0, %v132
    %v134 = vsub.f32 1.0, %v133
    %v135 = vmul.f32 %v132, %v134
    %v136 = vadd.f32 %v132, %v135
    %vm137 = vweird.f32 %v132
    %v138 = vsel %vm137, %v132, %v136
    %v139 = vmul.f32 %v129, %v138
    %v140 = vmul.f32 %v131, %v138
    %v141 = vsub.f32 %v126, %v139
    %v142 = vsub.f32 %v127, %v140
    %v143 = vmul.f32 %v141, %v141
    %v144 = vmul.f32 %v142, %v142
    %145 = vadd.xlane.f32.xlu0 %v143
    %v146 = vpop.xlane.xlu0 %145
    %147 = vadd.xlane.f32.xlu0 %v144
    %v148 = vpop.xlane.xlu0 %147
    %v149 = vmul.f32 %v146, %v138
    %v150 = vmul.f32 %v148, %v138
    %v151 = vadd.f32 %v149, 1e-06
    %v152 = vadd.f32 %v150, 1e-06
    %v153 = vrsqrt.pop %v151
    %v154 = vmul.f32 %v153, %v151
    %v155 = vmul.f32 %v154, %v153
    %v156 = vmul.f32 0.5, %v155
    %v157 = vsub.f32 1.5, %v156
    %v158 = vmul.f32 %v153, %v157
    %vm159 = vweird.f32 %v151
    %vm160 = vweird.f32 %v153
    %vm161 = vmor %vm159, %vm160
    %v162 = vsel %vm161, %v153, %v158
    %v163 = vrsqrt.pop %v152
    %v164 = vmul.f32 %v163, %v152
    %v165 = vmul.f32 %v164, %v163
    %v166 = vmul.f32 0.5, %v165
    %v167 = vsub.f32 1.5, %v166
    %v168 = vmul.f32 %v163, %v167
    %vm169 = vweird.f32 %v152
    %vm170 = vweird.f32 %v163
    %vm171 = vmor %vm169, %vm170
    %v172 = vsel %vm171, %v163, %v168
    %v173 = vmul.f32 %v141, %v162
    %v174 = vmul.f32 %v142, %v172
    %v175 = vld [vmem:[%s3] sm:$0x1]
    %v177 = vperm.slane %v175, 0
    %v179 = vmul.f32 %v173, %v177
    %v180 = vmul.f32 %v174, %v177
    %v181 = vld [vmem:[%s4] sm:$0x1]
    %v183 = vperm.slane %v181, 0
    %v185 = vadd.f32 %v179, %v183
    %v186 = vadd.f32 %v180, %v183
    %v187 = vld [vmem:[#allocation2] sm:$0xff]
    %v188 = vld [vmem:[#allocation2 + $0x8] sm:$0xff]
    %v189 = vld [vmem:[#allocation2 + $0x10] sm:$0xff]
    %v190 = vld [vmem:[#allocation2 + $0x18] sm:$0xff]
    %v191 = vld [vmem:[#allocation2 + $0x20] sm:$0xff]
    %v192 = vld [vmem:[#allocation2 + $0x28] sm:$0xff]
    %v193 = vld [vmem:[#allocation2 + $0x30] sm:$0xff]
    %v194 = vld [vmem:[#allocation2 + $0x38] sm:$0xff]
    %v195 = vld [vmem:[#allocation2 + $0x40] sm:$0xff]
    %v196 = vld [vmem:[#allocation2 + $0x48] sm:$0xff]
    %v197 = vld [vmem:[#allocation2 + $0x50] sm:$0xff]
    %v198 = vld [vmem:[#allocation2 + $0x58] sm:$0xff]
    %v199 = vld [vmem:[#allocation2 + $0x60] sm:$0xff]
    %v200 = vld [vmem:[#allocation2 + $0x68] sm:$0xff]
    %v201 = vld [vmem:[#allocation2 + $0x70] sm:$0xff]
    %v202 = vld [vmem:[#allocation2 + $0x78] sm:$0xff]
    %v203 = vld [vmem:[#allocation2 + $0x80] sm:$0xff]
    %v204 = vld [vmem:[#allocation2 + $0x88] sm:$0xff]
    %v205 = vld [vmem:[#allocation2 + $0x90] sm:$0xff]
    %v206 = vld [vmem:[#allocation2 + $0x98] sm:$0xff]
    %v207 = vld [vmem:[#allocation2 + $0xa0] sm:$0xff]
    %v208 = vld [vmem:[#allocation2 + $0xa8] sm:$0xff]
    %v209 = vld [vmem:[#allocation2 + $0xb0] sm:$0xff]
    %v210 = vld [vmem:[#allocation2 + $0xb8] sm:$0xff]
    %v211 = vld [vmem:[#allocation2 + $0xc0] sm:$0xff]
    %v212 = vld [vmem:[#allocation2 + $0xc8] sm:$0xff]
    %v213 = vld [vmem:[#allocation2 + $0xd0] sm:$0xff]
    %v214 = vld [vmem:[#allocation2 + $0xd8] sm:$0xff]
    %v215 = vld [vmem:[#allocation2 + $0xe0] sm:$0xff]
    %v216 = vld [vmem:[#allocation2 + $0xe8] sm:$0xff]
    %v217 = vld [vmem:[#allocation2 + $0xf0] sm:$0xff]
    %v218 = vld [vmem:[#allocation2 + $0xf8] sm:$0xff]
    %v219 = vld [vmem:[#allocation2 + $0x100] sm:$0xff]
    %v220 = vld [vmem:[#allocation2 + $0x108] sm:$0xff]
    %v221 = vld [vmem:[#allocation2 + $0x110] sm:$0xff]
    %v222 = vld [vmem:[#allocation2 + $0x118] sm:$0xff]
    %v223 = vld [vmem:[#allocation2 + $0x120] sm:$0xff]
    %v224 = vld [vmem:[#allocation2 + $0x128] sm:$0xff]
    %v225 = vld [vmem:[#allocation2 + $0x130] sm:$0xff]
    %v226 = vld [vmem:[#allocation2 + $0x138] sm:$0xff]
    %v227 = vld [vmem:[#allocation2 + $0x140] sm:$0xff]
    %v228 = vld [vmem:[#allocation2 + $0x148] sm:$0xff]
    %v229 = vld [vmem:[#allocation2 + $0x150] sm:$0xff]
    %v230 = vld [vmem:[#allocation2 + $0x158] sm:$0xff]
    %v231 = vld [vmem:[#allocation2 + $0x160] sm:$0xff]
    %v232 = vld [vmem:[#allocation2 + $0x168] sm:$0xff]
    %v233 = vld [vmem:[#allocation2 + $0x170] sm:$0xff]
    %v234 = vld [vmem:[#allocation2 + $0x178] sm:$0xff]
    %v235 = vld [vmem:[#allocation2 + $0x180] sm:$0xff]
    %v236 = vld [vmem:[#allocation2 + $0x188] sm:$0xff]
    %v237 = vld [vmem:[#allocation2 + $0x190] sm:$0xff]
    %v238 = vld [vmem:[#allocation2 + $0x198] sm:$0xff]
    %v239 = vld [vmem:[#allocation2 + $0x1a0] sm:$0xff]
    %v240 = vld [vmem:[#allocation2 + $0x1a8] sm:$0xff]
    %v241 = vld [vmem:[#allocation2 + $0x1b0] sm:$0xff]
    %v242 = vld [vmem:[#allocation2 + $0x1b8] sm:$0xff]
    %v243 = vld [vmem:[#allocation2 + $0x1c0] sm:$0xff]
    %v244 = vld [vmem:[#allocation2 + $0x1c8] sm:$0xff]
    %v245 = vld [vmem:[#allocation2 + $0x1d0] sm:$0xff]
    %v246 = vld [vmem:[#allocation2 + $0x1d8] sm:$0xff]
    %v247 = vld [vmem:[#allocation2 + $0x1e0] sm:$0xff]
    %v248 = vld [vmem:[#allocation2 + $0x1e8] sm:$0xff]
    %v249 = vld [vmem:[#allocation2 + $0x1f0] sm:$0xff]
    %v250 = vld [vmem:[#allocation2 + $0x1f8] sm:$0xff]
    %v251 = vld [vmem:[%s6] sm:$0xf]
    %v253 = vperm.slane %v251, 0
    %v254 = vperm.slane %v251, 1
    %v255 = vperm.slane %v251, 2
    %v256 = vperm.slane %v251, 3
    %261 = vmatpush.msra.mxu0 %v247
    %262 = vmatpush.msra.mxu0 %v243
    %263 = vmatpush.msra.mxu0 %v239
    %264 = vmatpush.msra.mxu0 %v235
    %265 = vmatpush.msra.mxu0 %v231
    %266 = vmatpush.msra.mxu0 %v227
    %267 = vmatpush.msra.mxu0 %v223
    %268 = vmatpush.msra.mxu0 %v219
    %269 = vmatpush.msra.mxu0 %v215
    %270 = vmatpush.msra.mxu0 %v211
    %271 = vmatpush.msra.mxu0 %v207
    %272 = vmatpush.msra.mxu0 %v203
    %273 = vmatpush.msra.mxu0 %v199
    %274 = vmatpush.msra.mxu0 %v195
    %275 = vmatpush.msra.mxu0 %v191
    %276 = vmatpush.msra.mxu0 %v187
    %277 = vmatmul.f32.gmra.mxu0 %v185
    %v278 = vpop.f32.mrf.mxu0
    %v279 = vadd.f32 %v253, %v278
    %280 = vmatmul.f32.gmra.mxu0 %v186
    %v281 = vpop.f32.mrf.mxu0
    %v282 = vadd.f32 %v253, %v281
    %283 = vdwg.mxu0
    %284 = vmatpush.msra.mxu0 %v248
    %285 = vmatpush.msra.mxu0 %v244
    %286 = vmatpush.msra.mxu0 %v240
    %287 = vmatpush.msra.mxu0 %v236
    %288 = vmatpush.msra.mxu0 %v232
    %289 = vmatpush.msra.mxu0 %v228
    %290 = vmatpush.msra.mxu0 %v224
    %291 = vmatpush.msra.mxu0 %v220
    %292 = vmatpush.msra.mxu0 %v216
    %293 = vmatpush.msra.mxu0 %v212
    %294 = vmatpush.msra.mxu0 %v208
    %295 = vmatpush.msra.mxu0 %v204
    %296 = vmatpush.msra.mxu0 %v200
    %297 = vmatpush.msra.mxu0 %v196
    %298 = vmatpush.msra.mxu0 %v192
    %299 = vmatpush.msra.mxu0 %v188
    %300 = vmatmul.f32.gmra.mxu0 %v185
    %v301 = vpop.f32.mrf.mxu0
    %v302 = vadd.f32 %v254, %v301
    %303 = vmatmul.f32.gmra.mxu0 %v186
    %v304 = vpop.f32.mrf.mxu0
    %v305 = vadd.f32 %v254, %v304
    %306 = vdwg.mxu0
    %307 = vmatpush.msra.mxu0 %v249
    %308 = vmatpush.msra.mxu0 %v245
    %309 = vmatpush.msra.mxu0 %v241
    %310 = vmatpush.msra.mxu0 %v237
    %311 = vmatpush.msra.mxu0 %v233
    %312 = vmatpush.msra.mxu0 %v229
    %313 = vmatpush.msra.mxu0 %v225
    %314 = vmatpush.msra.mxu0 %v221
    %315 = vmatpush.msra.mxu0 %v217
    %316 = vmatpush.msra.mxu0 %v213
    %317 = vmatpush.msra.mxu0 %v209
    %318 = vmatpush.msra.mxu0 %v205
    %319 = vmatpush.msra.mxu0 %v201
    %320 = vmatpush.msra.mxu0 %v197
    %321 = vmatpush.msra.mxu0 %v193
    %322 = vmatpush.msra.mxu0 %v189
    %323 = vmatmul.f32.gmra.mxu0 %v185
    %v324 = vpop.f32.mrf.mxu0
    %v325 = vadd.f32 %v255, %v324
    %326 = vmatmul.f32.gmra.mxu0 %v186
    %v327 = vpop.f32.mrf.mxu0
    %v328 = vadd.f32 %v255, %v327
    %329 = vdwg.mxu0
    %330 = vmatpush.msra.mxu0 %v250
    %331 = vmatpush.msra.mxu0 %v246
    %332 = vmatpush.msra.mxu0 %v242
    %333 = vmatpush.msra.mxu0 %v238
    %334 = vmatpush.msra.mxu0 %v234
    %335 = vmatpush.msra.mxu0 %v230
    %336 = vmatpush.msra.mxu0 %v226
    %337 = vmatpush.msra.mxu0 %v222
    %338 = vmatpush.msra.mxu0 %v218
    %339 = vmatpush.msra.mxu0 %v214
    %340 = vmatpush.msra.mxu0 %v210
    %341 = vmatpush.msra.mxu0 %v206
    %342 = vmatpush.msra.mxu0 %v202
    %343 = vmatpush.msra.mxu0 %v198
    %344 = vmatpush.msra.mxu0 %v194
    %345 = vmatpush.msra.mxu0 %v190
    %346 = vmatmul.f32.gmra.mxu0 %v185
    %v347 = vpop.f32.mrf.mxu0
    %v348 = vadd.f32 %v256, %v347
    %349 = vmatmul.f32.gmra.mxu0 %v186
    %v350 = vpop.f32.mrf.mxu0
    %v351 = vadd.f32 %v256, %v350
    %352 = vdwg.mxu0
    %v353 = vmul.f32 %v279, 0.5
    %v354 = vmul.f32 %v302, 0.5
    %v355 = vmul.f32 %v325, 0.5
    %v356 = vmul.f32 %v348, 0.5
    %v357 = vmul.f32 %v282, 0.5
    %v358 = vmul.f32 %v305, 0.5
    %v359 = vmul.f32 %v328, 0.5
    %v360 = vmul.f32 %v351, 0.5
    %v361 = vmul.f32 %v279, 0.70710677
    %v362 = vmul.f32 %v302, 0.70710677
    %v363 = vmul.f32 %v325, 0.70710677
    %v364 = vmul.f32 %v348, 0.70710677
    %v365 = vmul.f32 %v282, 0.70710677
    %v366 = vmul.f32 %v305, 0.70710677
    %v367 = vmul.f32 %v328, 0.70710677
    %v368 = vmul.f32 %v351, 0.70710677
    %v369 = vand.u32 2147483647, %v361
    %v370 = vand.u32 2147483647, %v362
    %v371 = vand.u32 2147483647, %v363
    %v372 = vand.u32 2147483647, %v364
    %v373 = vand.u32 2147483647, %v365
    %v374 = vand.u32 2147483647, %v366
    %v375 = vand.u32 2147483647, %v367
    %v376 = vand.u32 2147483647, %v368
    %v377 = vmul.f32 %v369, 0.3275911
    %v378 = vmul.f32 %v370, 0.3275911
    %v379 = vmul.f32 %v371, 0.3275911
    %v380 = vmul.f32 %v372, 0.3275911
    %v381 = vmul.f32 %v373, 0.3275911
    %v382 = vmul.f32 %v374, 0.3275911
    %v383 = vmul.f32 %v375, 0.3275911
    %v384 = vmul.f32 %v376, 0.3275911
    %v385 = vadd.f32 %v377, 1.0
    %v386 = vadd.f32 %v378, 1.0
    %v387 = vadd.f32 %v379, 1.0
    %v388 = vadd.f32 %v380, 1.0
    %v389 = vadd.f32 %v381, 1.0
    %v390 = vadd.f32 %v382, 1.0
    %v391 = vadd.f32 %v383, 1.0
    %v392 = vadd.f32 %v384, 1.0
    %v393 = vrcp.pop %v385
    %v394 = vmul.f32 %v385, %v393
    %v395 = vsub.f32 1.0, %v394
    %v396 = vmul.f32 %v393, %v395
    %v397 = vadd.f32 %v393, %v396
    %vm398 = vweird.f32 %v385
    %vm399 = vweird.f32 %v393
    %vm400 = vmor %vm398, %vm399
    %v401 = vsel %vm400, %v393, %v397
    %v402 = vand.u32 2147483647, %v385
    %vm403 = vcmp.eq.f32.partialorder %v402, 8.507059e+37
    %v404 = vand.u32 %v385, 2147483648
    %v405 = vor.u32 1.1754944e-38, %v404
    %v406 = vsel %vm403, %v405, %v401
    %v407 = vmul.f32 1.0, %v406
    %v408 = vrcp.pop %v386
    %v409 = vmul.f32 %v386, %v408
    %v410 = vsub.f32 1.0, %v409
    %v411 = vmul.f32 %v408, %v410
    %v412 = vadd.f32 %v408, %v411
    %vm413 = vweird.f32 %v386
    %vm414 = vweird.f32 %v408
    %vm415 = vmor %vm413, %vm414
    %v416 = vsel %vm415, %v408, %v412
    %v417 = vand.u32 2147483647, %v386
    %vm418 = vcmp.eq.f32.partialorder %v417, 8.507059e+37
    %v419 = vand.u32 %v386, 2147483648
    %v420 = vor.u32 1.1754944e-38, %v419
    %v421 = vsel %vm418, %v420, %v416
    %v422 = vmul.f32 1.0, %v421
    %v423 = vrcp.pop %v387
    %v424 = vmul.f32 %v387, %v423
    %v425 = vsub.f32 1.0, %v424
    %v426 = vmul.f32 %v423, %v425
    %v427 = vadd.f32 %v423, %v426
    %vm428 = vweird.f32 %v387
    %vm429 = vweird.f32 %v423
    %vm430 = vmor %vm428, %vm429
    %v431 = vsel %vm430, %v423, %v427
    %v432 = vand.u32 2147483647, %v387
    %vm433 = vcmp.eq.f32.partialorder %v432, 8.507059e+37
    %v434 = vand.u32 %v387, 2147483648
    %v435 = vor.u32 1.1754944e-38, %v434
    %v436 = vsel %vm433, %v435, %v431
    %v437 = vmul.f32 1.0, %v436
    %v438 = vrcp.pop %v388
    %v439 = vmul.f32 %v388, %v438
    %v440 = vsub.f32 1.0, %v439
    %v441 = vmul.f32 %v438, %v440
    %v442 = vadd.f32 %v438, %v441
    %vm443 = vweird.f32 %v388
    %vm444 = vweird.f32 %v438
    %vm445 = vmor %vm443, %vm444
    %v446 = vsel %vm445, %v438, %v442
    %v447 = vand.u32 2147483647, %v388
    %vm448 = vcmp.eq.f32.partialorder %v447, 8.507059e+37
    %v449 = vand.u32 %v388, 2147483648
    %v450 = vor.u32 1.1754944e-38, %v449
    %v451 = vsel %vm448, %v450, %v446
    %v452 = vmul.f32 1.0, %v451
    %v453 = vrcp.pop %v389
    %v454 = vmul.f32 %v389, %v453
    %v455 = vsub.f32 1.0, %v454
    %v456 = vmul.f32 %v453, %v455
    %v457 = vadd.f32 %v453, %v456
    %vm458 = vweird.f32 %v389
    %vm459 = vweird.f32 %v453
    %vm460 = vmor %vm458, %vm459
    %v461 = vsel %vm460, %v453, %v457
    %v462 = vand.u32 2147483647, %v389
    %vm463 = vcmp.eq.f32.partialorder %v462, 8.507059e+37
    %v464 = vand.u32 %v389, 2147483648
    %v465 = vor.u32 1.1754944e-38, %v464
    %v466 = vsel %vm463, %v465, %v461
    %v467 = vmul.f32 1.0, %v466
    %v468 = vrcp.pop %v390
    %v469 = vmul.f32 %v390, %v468
    %v470 = vsub.f32 1.0, %v469
    %v471 = vmul.f32 %v468, %v470
    %v472 = vadd.f32 %v468, %v471
    %vm473 = vweird.f32 %v390
    %vm474 = vweird.f32 %v468
    %vm475 = vmor %vm473, %vm474
    %v476 = vsel %vm475, %v468, %v472
    %v477 = vand.u32 2147483647, %v390
    %vm478 = vcmp.eq.f32.partialorder %v477, 8.507059e+37
    %v479 = vand.u32 %v390, 2147483648
    %v480 = vor.u32 1.1754944e-38, %v479
    %v481 = vsel %vm478, %v480, %v476
    %v482 = vmul.f32 1.0, %v481
    %v483 = vrcp.pop %v391
    %v484 = vmul.f32 %v391, %v483
    %v485 = vsub.f32 1.0, %v484
    %v486 = vmul.f32 %v483, %v485
    %v487 = vadd.f32 %v483, %v486
    %vm488 = vweird.f32 %v391
    %vm489 = vweird.f32 %v483
    %vm490 = vmor %vm488, %vm489
    %v491 = vsel %vm490, %v483, %v487
    %v492 = vand.u32 2147483647, %v391
    %vm493 = vcmp.eq.f32.partialorder %v492, 8.507059e+37
    %v494 = vand.u32 %v391, 2147483648
    %v495 = vor.u32 1.1754944e-38, %v494
    %v496 = vsel %vm493, %v495, %v491
    %v497 = vmul.f32 1.0, %v496
    %v498 = vrcp.pop %v392
    %v499 = vmul.f32 %v392, %v498
    %v500 = vsub.f32 1.0, %v499
    %v501 = vmul.f32 %v498, %v500
    %v502 = vadd.f32 %v498, %v501
    %vm503 = vweird.f32 %v392
    %vm504 = vweird.f32 %v498
    %vm505 = vmor %vm503, %vm504
    %v506 = vsel %vm505, %v498, %v502
    %v507 = vand.u32 2147483647, %v392
    %vm508 = vcmp.eq.f32.partialorder %v507, 8.507059e+37
    %v509 = vand.u32 %v392, 2147483648
    %v510 = vor.u32 1.1754944e-38, %v509
    %v511 = vsel %vm508, %v510, %v506
    %v512 = vmul.f32 1.0, %v511
    %v513 = vmul.f32 %v407, 1.0614054
    %v514 = vmul.f32 %v422, 1.0614054
    %v515 = vmul.f32 %v437, 1.0614054
    %v516 = vmul.f32 %v452, 1.0614054
    %v517 = vmul.f32 %v467, 1.0614054
    %v518 = vmul.f32 %v482, 1.0614054
    %v519 = vmul.f32 %v497, 1.0614054
    %v520 = vmul.f32 %v512, 1.0614054
    %v521 = vadd.f32 %v513, -1.4531521
    %v522 = vadd.f32 %v514, -1.4531521
    %v523 = vadd.f32 %v515, -1.4531521
    %v524 = vadd.f32 %v516, -1.4531521
    %v525 = vadd.f32 %v517, -1.4531521
    %v526 = vadd.f32 %v518, -1.4531521
    %v527 = vadd.f32 %v519, -1.4531521
    %v528 = vadd.f32 %v520, -1.4531521
    %v529 = vmul.f32 %v521, %v407
    %v530 = vmul.f32 %v522, %v422
    %v531 = vmul.f32 %v523, %v437
    %v532 = vmul.f32 %v524, %v452
    %v533 = vmul.f32 %v525, %v467
    %v534 = vmul.f32 %v526, %v482
    %v535 = vmul.f32 %v527, %v497
    %v536 = vmul.f32 %v528, %v512
    %v537 = vadd.f32 %v529, 1.4214138
    %v538 = vadd.f32 %v530, 1.4214138
    %v539 = vadd.f32 %v531, 1.4214138
    %v540 = vadd.f32 %v532, 1.4214138
    %v541 = vadd.f32 %v533, 1.4214138
    %v542 = vadd.f32 %v534, 1.4214138
    %v543 = vadd.f32 %v535, 1.4214138
    %v544 = vadd.f32 %v536, 1.4214138
    %v545 = vmul.f32 %v537, %v407
    %v546 = vmul.f32 %v538, %v422
    %v547 = vmul.f32 %v539, %v437
    %v548 = vmul.f32 %v540, %v452
    %v549 = vmul.f32 %v541, %v467
    %v550 = vmul.f32 %v542, %v482
    %v551 = vmul.f32 %v543, %v497
    %v552 = vmul.f32 %v544, %v512
    %v553 = vadd.f32 %v545, -0.28449672
    %v554 = vadd.f32 %v546, -0.28449672
    %v555 = vadd.f32 %v547, -0.28449672
    %v556 = vadd.f32 %v548, -0.28449672
    %v557 = vadd.f32 %v549, -0.28449672
    %v558 = vadd.f32 %v550, -0.28449672
    %v559 = vadd.f32 %v551, -0.28449672
    %v560 = vadd.f32 %v552, -0.28449672
    %v561 = vmul.f32 %v553, %v407
    %v562 = vmul.f32 %v554, %v422
    %v563 = vmul.f32 %v555, %v437
    %v564 = vmul.f32 %v556, %v452
    %v565 = vmul.f32 %v557, %v467
    %v566 = vmul.f32 %v558, %v482
    %v567 = vmul.f32 %v559, %v497
    %v568 = vmul.f32 %v560, %v512
    %v569 = vadd.f32 %v561, 0.2548296
    %v570 = vadd.f32 %v562, 0.2548296
    %v571 = vadd.f32 %v563, 0.2548296
    %v572 = vadd.f32 %v564, 0.2548296
    %v573 = vadd.f32 %v565, 0.2548296
    %v574 = vadd.f32 %v566, 0.2548296
    %v575 = vadd.f32 %v567, 0.2548296
    %v576 = vadd.f32 %v568, 0.2548296
    %v577 = vmul.f32 %v569, %v407
    %v578 = vmul.f32 %v570, %v422
    %v579 = vmul.f32 %v571, %v437
    %v580 = vmul.f32 %v572, %v452
    %v581 = vmul.f32 %v573, %v467
    %v582 = vmul.f32 %v574, %v482
    %v583 = vmul.f32 %v575, %v497
    %v584 = vmul.f32 %v576, %v512
    %v585 = vsub.f32 0.0, %v369
    %v586 = vsub.f32 0.0, %v370
    %v587 = vsub.f32 0.0, %v371
    %v588 = vsub.f32 0.0, %v372
    %v589 = vsub.f32 0.0, %v373
    %v590 = vsub.f32 0.0, %v374
    %v591 = vsub.f32 0.0, %v375
    %v592 = vsub.f32 0.0, %v376
    %v593 = vmul.f32 %v585, %v369
    %v594 = vmul.f32 %v586, %v370
    %v595 = vmul.f32 %v587, %v371
    %v596 = vmul.f32 %v588, %v372
    %v597 = vmul.f32 %v589, %v373
    %v598 = vmul.f32 %v590, %v374
    %v599 = vmul.f32 %v591, %v375
    %v600 = vmul.f32 %v592, %v376
    %v601 = vmul.f32 %v593, 1.442695
    %v602 = vpow.pop %v601
    %v603 = vmul.f32 %v594, 1.442695
    %v604 = vpow.pop %v603
    %v605 = vmul.f32 %v595, 1.442695
    %v606 = vpow.pop %v605
    %v607 = vmul.f32 %v596, 1.442695
    %v608 = vpow.pop %v607
    %v609 = vmul.f32 %v597, 1.442695
    %v610 = vpow.pop %v609
    %v611 = vmul.f32 %v598, 1.442695
    %v612 = vpow.pop %v611
    %v613 = vmul.f32 %v599, 1.442695
    %v614 = vpow.pop %v613
    %v615 = vmul.f32 %v600, 1.442695
    %v616 = vpow.pop %v615
    %v617 = vmul.f32 %v577, %v602
    %v618 = vmul.f32 %v578, %v604
    %v619 = vmul.f32 %v579, %v606
    %v620 = vmul.f32 %v580, %v608
    %v621 = vmul.f32 %v581, %v610
    %v622 = vmul.f32 %v582, %v612
    %v623 = vmul.f32 %v583, %v614
    %v624 = vmul.f32 %v584, %v616
    %v625 = vsub.f32 1.0, %v617
    %v626 = vsub.f32 1.0, %v618
    %v627 = vsub.f32 1.0, %v619
    %v628 = vsub.f32 1.0, %v620
    %v629 = vsub.f32 1.0, %v621
    %v630 = vsub.f32 1.0, %v622
    %v631 = vsub.f32 1.0, %v623
    %v632 = vsub.f32 1.0, %v624
    %vm633 = vcmp.lt.f32.partialorder %v361, 0.0
    %vm634 = vcmp.lt.f32.partialorder %v362, 0.0
    %vm635 = vcmp.lt.f32.partialorder %v363, 0.0
    %vm636 = vcmp.lt.f32.partialorder %v364, 0.0
    %vm637 = vcmp.lt.f32.partialorder %v365, 0.0
    %vm638 = vcmp.lt.f32.partialorder %v366, 0.0
    %vm639 = vcmp.lt.f32.partialorder %v367, 0.0
    %vm640 = vcmp.lt.f32.partialorder %v368, 0.0
    %v641 = vsub.f32 0.0, %v625
    %v642 = vsub.f32 0.0, %v626
    %v643 = vsub.f32 0.0, %v627
    %v644 = vsub.f32 0.0, %v628
    %v645 = vsub.f32 0.0, %v629
    %v646 = vsub.f32 0.0, %v630
    %v647 = vsub.f32 0.0, %v631
    %v648 = vsub.f32 0.0, %v632
    %v649 = vsel %vm633, %v641, %v625
    %v650 = vsel %vm634, %v642, %v626
    %v651 = vsel %vm635, %v643, %v627
    %v652 = vsel %vm636, %v644, %v628
    %v653 = vsel %vm637, %v645, %v629
    %v654 = vsel %vm638, %v646, %v630
    %v655 = vsel %vm639, %v647, %v631
    %v656 = vsel %vm640, %v648, %v632
    %v657 = vadd.f32 %v649, 1.0
    %v658 = vadd.f32 %v650, 1.0
    %v659 = vadd.f32 %v651, 1.0
    %v660 = vadd.f32 %v652, 1.0
    %v661 = vadd.f32 %v653, 1.0
    %v662 = vadd.f32 %v654, 1.0
    %v663 = vadd.f32 %v655, 1.0
    %v664 = vadd.f32 %v656, 1.0
    %v665 = vmul.f32 %v353, %v657
    %v666 = vmul.f32 %v354, %v658
    %v667 = vmul.f32 %v355, %v659
    %v668 = vmul.f32 %v356, %v660
    %v669 = vmul.f32 %v357, %v661
    %v670 = vmul.f32 %v358, %v662
    %v671 = vmul.f32 %v359, %v663
    %v672 = vmul.f32 %v360, %v664
    %v673 = vld [vmem:[#allocation5] sm:$0xff]
    %v674 = vld [vmem:[#allocation5 + $0x8] sm:$0xff]
    %v675 = vld [vmem:[#allocation5 + $0x10] sm:$0xff]
    %v676 = vld [vmem:[#allocation5 + $0x18] sm:$0xff]
    %v677 = vld [vmem:[#allocation5 + $0x20] sm:$0xff]
    %v678 = vld [vmem:[#allocation5 + $0x28] sm:$0xff]
    %v679 = vld [vmem:[#allocation5 + $0x30] sm:$0xff]
    %v680 = vld [vmem:[#allocation5 + $0x38] sm:$0xff]
    %v681 = vld [vmem:[#allocation5 + $0x40] sm:$0xff]
    %v682 = vld [vmem:[#allocation5 + $0x48] sm:$0xff]
    %v683 = vld [vmem:[#allocation5 + $0x50] sm:$0xff]
    %v684 = vld [vmem:[#allocation5 + $0x58] sm:$0xff]
    %v685 = vld [vmem:[#allocation5 + $0x60] sm:$0xff]
    %v686 = vld [vmem:[#allocation5 + $0x68] sm:$0xff]
    %v687 = vld [vmem:[#allocation5 + $0x70] sm:$0xff]
    %v688 = vld [vmem:[#allocation5 + $0x78] sm:$0xff]
    %v689 = vld [vmem:[#allocation5 + $0x80] sm:$0xff]
    %v690 = vld [vmem:[#allocation5 + $0x88] sm:$0xff]
    %v691 = vld [vmem:[#allocation5 + $0x90] sm:$0xff]
    %v692 = vld [vmem:[#allocation5 + $0x98] sm:$0xff]
    %v693 = vld [vmem:[#allocation5 + $0xa0] sm:$0xff]
    %v694 = vld [vmem:[#allocation5 + $0xa8] sm:$0xff]
    %v695 = vld [vmem:[#allocation5 + $0xb0] sm:$0xff]
    %v696 = vld [vmem:[#allocation5 + $0xb8] sm:$0xff]
    %v697 = vld [vmem:[#allocation5 + $0xc0] sm:$0xff]
    %v698 = vld [vmem:[#allocation5 + $0xc8] sm:$0xff]
    %v699 = vld [vmem:[#allocation5 + $0xd0] sm:$0xff]
    %v700 = vld [vmem:[#allocation5 + $0xd8] sm:$0xff]
    %v701 = vld [vmem:[#allocation5 + $0xe0] sm:$0xff]
    %v702 = vld [vmem:[#allocation5 + $0xe8] sm:$0xff]
    %v703 = vld [vmem:[#allocation5 + $0xf0] sm:$0xff]
    %v704 = vld [vmem:[#allocation5 + $0xf8] sm:$0xff]
    %v705 = vld [vmem:[#allocation5 + $0x100] sm:$0xff]
    %v706 = vld [vmem:[#allocation5 + $0x108] sm:$0xff]
    %v707 = vld [vmem:[#allocation5 + $0x110] sm:$0xff]
    %v708 = vld [vmem:[#allocation5 + $0x118] sm:$0xff]
    %v709 = vld [vmem:[#allocation5 + $0x120] sm:$0xff]
    %v710 = vld [vmem:[#allocation5 + $0x128] sm:$0xff]
    %v711 = vld [vmem:[#allocation5 + $0x130] sm:$0xff]
    %v712 = vld [vmem:[#allocation5 + $0x138] sm:$0xff]
    %v713 = vld [vmem:[#allocation5 + $0x140] sm:$0xff]
    %v714 = vld [vmem:[#allocation5 + $0x148] sm:$0xff]
    %v715 = vld [vmem:[#allocation5 + $0x150] sm:$0xff]
    %v716 = vld [vmem:[#allocation5 + $0x158] sm:$0xff]
    %v717 = vld [vmem:[#allocation5 + $0x160] sm:$0xff]
    %v718 = vld [vmem:[#allocation5 + $0x168] sm:$0xff]
    %v719 = vld [vmem:[#allocation5 + $0x170] sm:$0xff]
    %v720 = vld [vmem:[#allocation5 + $0x178] sm:$0xff]
    %v721 = vld [vmem:[#allocation5 + $0x180] sm:$0xff]
    %v722 = vld [vmem:[#allocation5 + $0x188] sm:$0xff]
    %v723 = vld [vmem:[#allocation5 + $0x190] sm:$0xff]
    %v724 = vld [vmem:[#allocation5 + $0x198] sm:$0xff]
    %v725 = vld [vmem:[#allocation5 + $0x1a0] sm:$0xff]
    %v726 = vld [vmem:[#allocation5 + $0x1a8] sm:$0xff]
    %v727 = vld [vmem:[#allocation5 + $0x1b0] sm:$0xff]
    %v728 = vld [vmem:[#allocation5 + $0x1b8] sm:$0xff]
    %v729 = vld [vmem:[#allocation5 + $0x1c0] sm:$0xff]
    %v730 = vld [vmem:[#allocation5 + $0x1c8] sm:$0xff]
    %v731 = vld [vmem:[#allocation5 + $0x1d0] sm:$0xff]
    %v732 = vld [vmem:[#allocation5 + $0x1d8] sm:$0xff]
    %v733 = vld [vmem:[#allocation5 + $0x1e0] sm:$0xff]
    %v734 = vld [vmem:[#allocation5 + $0x1e8] sm:$0xff]
    %v735 = vld [vmem:[#allocation5 + $0x1f0] sm:$0xff]
    %v736 = vld [vmem:[#allocation5 + $0x1f8] sm:$0xff]
    %v737 = vld [vmem:[%s8] sm:$0x1]
    %v739 = vperm.slane %v737, 0
    %741 = vmatpush.msra.mxu0 %v688
    %742 = vmatpush.msra.mxu0 %v687
    %743 = vmatpush.msra.mxu0 %v686
    %744 = vmatpush.msra.mxu0 %v685
    %745 = vmatpush.msra.mxu0 %v684
    %746 = vmatpush.msra.mxu0 %v683
    %747 = vmatpush.msra.mxu0 %v682
    %748 = vmatpush.msra.mxu0 %v681
    %749 = vmatpush.msra.mxu0 %v680
    %750 = vmatpush.msra.mxu0 %v679
    %751 = vmatpush.msra.mxu0 %v678
    %752 = vmatpush.msra.mxu0 %v677
    %753 = vmatpush.msra.mxu0 %v676
    %754 = vmatpush.msra.mxu0 %v675
    %755 = vmatpush.msra.mxu0 %v674
    %756 = vmatpush.msra.mxu0 %v673
    %757 = vmatmul.f32.gmra.mxu0 %v665
    %v758 = vpop.f32.mrf.mxu0
    %v759 = vadd.f32 %v739, %v758
    %760 = vmatmul.f32.gmra.mxu0 %v669
    %v761 = vpop.f32.mrf.mxu0
    %v762 = vadd.f32 %v739, %v761
    %763 = vdwg.mxu0
    %764 = vmatpush.msra.mxu0 %v704
    %765 = vmatpush.msra.mxu0 %v703
    %766 = vmatpush.msra.mxu0 %v702
    %767 = vmatpush.msra.mxu0 %v701
    %768 = vmatpush.msra.mxu0 %v700
    %769 = vmatpush.msra.mxu0 %v699
    %770 = vmatpush.msra.mxu0 %v698
    %771 = vmatpush.msra.mxu0 %v697
    %772 = vmatpush.msra.mxu0 %v696
    %773 = vmatpush.msra.mxu0 %v695
    %774 = vmatpush.msra.mxu0 %v694
    %775 = vmatpush.msra.mxu0 %v693
    %776 = vmatpush.msra.mxu0 %v692
    %777 = vmatpush.msra.mxu0 %v691
    %778 = vmatpush.msra.mxu0 %v690
    %779 = vmatpush.msra.mxu0 %v689
    %780 = vmatmul.f32.gmra.mxu0 %v666
    %v781 = vpop.f32.mrf.mxu0
    %v782 = vadd.f32 %v759, %v781
    %783 = vmatmul.f32.gmra.mxu0 %v670
    %v784 = vpop.f32.mrf.mxu0
    %v785 = vadd.f32 %v762, %v784
    %786 = vdwg.mxu0
    %787 = vmatpush.msra.mxu0 %v720
    %788 = vmatpush.msra.mxu0 %v719
    %789 = vmatpush.msra.mxu0 %v718
    %790 = vmatpush.msra.mxu0 %v717
    %791 = vmatpush.msra.mxu0 %v716
    %792 = vmatpush.msra.mxu0 %v715
    %793 = vmatpush.msra.mxu0 %v714
    %794 = vmatpush.msra.mxu0 %v713
    %795 = vmatpush.msra.mxu0 %v712
    %796 = vmatpush.msra.mxu0 %v711
    %797 = vmatpush.msra.mxu0 %v710
    %798 = vmatpush.msra.mxu0 %v709
    %799 = vmatpush.msra.mxu0 %v708
    %800 = vmatpush.msra.mxu0 %v707
    %801 = vmatpush.msra.mxu0 %v706
    %802 = vmatpush.msra.mxu0 %v705
    %803 = vmatmul.f32.gmra.mxu0 %v667
    %v804 = vpop.f32.mrf.mxu0
    %v805 = vadd.f32 %v782, %v804
    %806 = vmatmul.f32.gmra.mxu0 %v671
    %v807 = vpop.f32.mrf.mxu0
    %v808 = vadd.f32 %v785, %v807
    %809 = vdwg.mxu0
    %810 = vmatpush.msra.mxu0 %v736
    %811 = vmatpush.msra.mxu0 %v735
    %812 = vmatpush.msra.mxu0 %v734
    %813 = vmatpush.msra.mxu0 %v733
    %814 = vmatpush.msra.mxu0 %v732
    %815 = vmatpush.msra.mxu0 %v731
    %816 = vmatpush.msra.mxu0 %v730
    %817 = vmatpush.msra.mxu0 %v729
    %818 = vmatpush.msra.mxu0 %v728
    %819 = vmatpush.msra.mxu0 %v727
    %820 = vmatpush.msra.mxu0 %v726
    %821 = vmatpush.msra.mxu0 %v725
    %822 = vmatpush.msra.mxu0 %v724
    %823 = vmatpush.msra.mxu0 %v723
    %824 = vmatpush.msra.mxu0 %v722
    %825 = vmatpush.msra.mxu0 %v721
    %826 = vmatmul.f32.gmra.mxu0 %v668
    %v827 = vpop.f32.mrf.mxu0
    %v828 = vadd.f32 %v805, %v827
    %829 = vmatmul.f32.gmra.mxu0 %v672
    %v830 = vpop.f32.mrf.mxu0
    %v831 = vadd.f32 %v808, %v830
    %832 = vdwg.mxu0
    %v833 = vld [vmem:[%s9] sm:$0x1]
    %v835 = vperm.slane %v833, 0
    %v837 = vmul.f32 %v828, %v835
    %v838 = vmul.f32 %v831, %v835
    %v839 = vadd.f32 %v837, %v68
    %v840 = vadd.f32 %v838, %v69
    %841 = vst [vmem:[#allocation7] sm:$0xff] %v839
    %842 = vst [vmem:[#allocation7 + $0x8] sm:$0xff] %v840
    // Predicated region
    $region50: #{convnext_block_1d.1} parent=1 // pred_check
      _
    $region51: #{convnext_block_1d.1} parent=1 // pred_check_branch
      %844 = sbr.rel (0) target = $region53
    $region52: #{convnext_block_1d.1} parent=1 // pred_region
      %846 = vsyncadd [#allocation4], 0
      %s847 = sshll.u32 [#allocation7], 4
      %s848 = int_to_ptr.vmem [resolvable:$true] %s847
      %s849 = sshll.u32 %s10, 4
      %s850 = int_to_ptr.hbm [resolvable:$true] %s849
      %855 = dma.vmem_to_hbm [thread:$0]  %s848, 256, %s850, [#allocation4], 128, 128, 8
    $region53: #{convnext_block_1d.1} parent=1 // pred_fallthru
      _
    // Predicated region
    $region54: #{convnext_block_1d.1} parent=1 // pred_check
      _
    $region55: #{convnext_block_1d.1} parent=1 // pred_check_branch
      %857 = sbr.rel (0) target = $region57
    $region56: #{convnext_block_1d.1} parent=1 // pred_region
      %859 = dma.done [#allocation4], 256
    $region57: #{convnext_block_1d.1} parent=1 // pred_fallthru
      _
    %860 = vsyncpa [#allocation3], 1
    %861 = vsyncpa [#allocation6], 1
    %862 = vsyncpa [#allocation4], 1

</llo_original>
